<compile_context>
chip_gen: v5e
topology: v5e:2x2
jax: 0.10.0
libtpu: 0.0.40
codegen_flags: <defaults>
</compile_context>

<pallas_src>
import jax
import jax.numpy as jnp
from jax.experimental import pallas as pl
from jax.experimental.pallas import tpu as pltpu

OUT = 4          # logical output width of the second Linear
OUT_PAD = 128    # lane-dense output width (real outputs live in the first 4 lanes)

_HAS_BUFFERED = hasattr(pl, "Buffered")


def _round_up(x: int, m: int) -> int:
    return ((x + m - 1) // m) * m


def _vmem_capacity_bytes() -> int:
    """Physical VMEM per TensorCore; conservative fallback if the query fails."""
    try:
        cap = getattr(pltpu.get_tpu_info(), "vmem_capacity_bytes", None)
        if cap:
            return int(cap)
    except Exception:
        pass
    return 64 * 1024 * 1024  # v7x-sized fallback (v5e/v6e have 128 MiB)


def _bbox_decoder_kernel(x_ref, w1_ref, b1_ref, w2_ref, b2_ref, o_ref, acc_ref):
    """One (row-tile, Hh-stripe) grid step.

    x_ref:   (TN, H)          token tile
    w1_ref:  (H, THH)         first Linear stripe, stored (in, out)
    b1_ref:  (1, THH)
    w2_ref:  (THH, OUT_PAD)   second Linear stripe, zero-padded to 128 lanes
    b2_ref:  (1, OUT_PAD)
    o_ref:   (TN, OUT_PAD)
    acc_ref: (TN, OUT_PAD)    f32 accumulator across Hh stripes
    """
    k = pl.program_id(1)

    @pl.when(k == 0)
    def _():
        acc_ref[...] = jnp.zeros_like(acc_ref)

    # ReLU(x @ W1 + b1) for this Hh stripe, accumulated into the 128-lane output.
    h = jnp.dot(x_ref[...], w1_ref[...], preferred_element_type=jnp.float32)
    h = jnp.maximum(h + b1_ref[...].astype(jnp.float32), 0.0)
    # NOTE: if W2 is bf16 this downcasts h before the 2nd matmul (documented
    # precision trade-off); with f32 weights it matches the f32 reference.
    acc_ref[...] += jnp.dot(h.astype(w2_ref.dtype), w2_ref[...],
                            preferred_element_type=jnp.float32)

    @pl.when(k == pl.num_programs(1) - 1)
    def _():
        y = acc_ref[...] + b2_ref[...].astype(jnp.float32)
        o_ref[...] = jnp.clip(y, 0.0, 1.0).astype(o_ref.dtype)   # .clamp(0, 1)


def bbox_decoder(x, w1, b1, w2, b2, *, tile_n=512, tile_hh=None, compute_dtype=None):
    """clamp(relu(x @ w1 + b1) @ w2 + b2, 0, 1).

    x: (..., H); w1: (H, H//2); b1: (H//2,); w2: (H//2, 4); b2: (4,).
    tile_hh: optional Hh stripe width (multiple of 128) to force weight streaming.
    compute_dtype: optional low-precision dtype (e.g. jnp.bfloat16) for the x/W1
      stream; accumulation stays f32.
    """
    orig_shape = x.shape
    H = orig_shape[-1]
    x2d = x.reshape(-1, H)
    N = x2d.shape[0]
    out_dtype = x2d.dtype

    if compute_dtype is not None:
        x2d = x2d.astype(compute_dtype)
        w1 = w1.astype(compute_dtype)

    Hh = w1.shape[1]
    x_item = jnp.dtype(x2d.dtype).itemsize
    w1_item = jnp.dtype(w1.dtype).itemsize
    w2_item = jnp.dtype(w2.dtype).itemsize
    out_item = jnp.dtype(out_dtype).itemsize
    sub = 8 if x_item >= 4 else 16          # sublane granularity for row tiles

    # ---- row tile ------------------------------------------------------------
    tile_n = max(sub, min(int(tile_n), _round_up(N, sub)))
    tile_n = _round_up(tile_n, sub)
    # Keep >= 2 row tiles whenever possible so both v7x TensorCores get work.
    if pl.cdiv(N, tile_n) < 2 and N > sub:
        tile_n = _round_up(max(sub, -(-N // 2)), sub)

    # ---- generation-aware VMEM budget ----------------------------------------
    vmem_cap = _vmem_capacity_bytes()
    budget = int(0.45 * vmem_cap)           # ~29 MiB on v7x, ~58 MiB on v5e/v6e

    def vmem_bytes(tn, thh, w_bufs):
        return int(
            2 * tn * H * x_item                  # x tile (double-buffered)
            + w_bufs * H * thh * w1_item         # W1 stripe
            + w_bufs * 8 * thh * w1_item         # b1 stripe (sublane padded)
            + w_bufs * thh * OUT_PAD * w2_item   # W2 stripe (lane padded)
            + 2 * 8 * OUT_PAD * w2_item          # b2
            + 2 * tn * OUT_PAD * out_item        # out tile (double-buffered)
            + tn * OUT_PAD * 4                   # f32 accumulator scratch
            + tn * thh * 4                       # f32 h intermediate
            + (tn * thh * w2_item if w2.dtype != jnp.float32 else 0)  # h cast copy
            + tn * OUT_PAD * 4)                  # f32 y temporary

    # ---- Hh striping (stream W1/W2 when resident weights do not fit) ----------
    if tile_hh is None:
        tile_hh = Hh                              # fully-resident weights
        w_bufs = 1 if _HAS_BUFFERED else 2
        if vmem_bytes(tile_n, tile_hh, w_bufs) > budget and Hh > 128:
            w_bufs = 2                            # streamed stripes -> double-buffer
            tile_hh = _round_up(Hh, 128)
            while tile_hh > 128 and vmem_bytes(tile_n, tile_hh, w_bufs) > budget:
                tile_hh = max(128, _round_up(tile_hh // 2, 128))
    if tile_hh < Hh:                              # stripes must be lane aligned
        tile_hh = max(128, _round_up(min(int(tile_hh), Hh), 128))
    else:
        tile_hh = Hh
    n_hh = pl.cdiv(Hh, tile_hh)
    hh_pad = n_hh * tile_hh
    w_bufs = 1 if (n_hh == 1 and _HAS_BUFFERED) else 2

    # ---- shrink the row tile if we are still over budget ----------------------
    while tile_n > 256 and vmem_bytes(tile_n, tile_hh, w_bufs) > budget:
        tile_n = _round_up(max(256, tile_n // 2), sub)
    while tile_n > sub and vmem_bytes(tile_n, tile_hh, w_bufs) > budget:
        tile_n = _round_up(max(sub, tile_n // 2), sub)

    # Declared limit assumes 2 weight buffers (covers the Buffered(1) fallback)
    # and is clamped below physical VMEM.
    vmem_limit = max(vmem_bytes(tile_n, tile_hh, 2) + (4 << 20), 32 << 20)
    vmem_limit = int(min(vmem_limit, int(0.92 * vmem_cap)))

    grid = (pl.cdiv(N, tile_n), n_hh)

    # ---- weights: pad Hh (if striped) and make the output lane-dense ----------
    b1p = b1.reshape(1, Hh)
    if hh_pad != Hh:                              # zero-pad -> padded stripes add 0
        w1 = jnp.pad(w1, ((0, 0), (0, hh_pad - Hh)))
        b1p = jnp.pad(b1p, ((0, 0), (0, hh_pad - Hh)))
        w2 = jnp.pad(w2, ((0, hh_pad - Hh), (0, 0)))
    w2p = jnp.zeros((hh_pad, OUT_PAD), w2.dtype).at[:, :OUT].set(w2)
    b2p = jnp.zeros((1, OUT_PAD), b2.dtype).at[0, :OUT].set(b2)

    # Logical (not padded) cost estimate.
    flops = 2 * N * H * Hh + 2 * N * Hh * OUT
    bytes_accessed = int(N * H * x_item + H * Hh * w1_item + Hh * OUT * w2_item
                         + Hh * w1_item + OUT * w2_item + N * OUT * out_item)

    def run(single_buffer_consts: bool):
        def const_spec(shape, index_map):
            # Constant-index blocks: a 2nd pipeline buffer is pure VMEM waste.
            if single_buffer_consts:
                return pl.BlockSpec(shape, index_map, pipeline_mode=pl.Buffered(1))
            return pl.BlockSpec(shape, index_map)

        if n_hh == 1:   # weights fully resident -> all constant-index
            w1_spec = const_spec((H, tile_hh), lambda i, k: (0, 0))
            b1_spec = const_spec((1, tile_hh), lambda i, k: (0, 0))
            w2_spec = const_spec((tile_hh, OUT_PAD), lambda i, k: (0, 0))
        else:           # streamed stripes -> keep default double-buffering
            w1_spec = pl.BlockSpec((H, tile_hh), lambda i, k: (0, k))
            b1_spec = pl.BlockSpec((1, tile_hh), lambda i, k: (0, k))
            w2_spec = pl.BlockSpec((tile_hh, OUT_PAD), lambda i, k: (k, 0))
        b2_spec = const_spec((1, OUT_PAD), lambda i, k: (0, 0))

        return pl.pallas_call(
            _bbox_decoder_kernel,
            out_shape=jax.ShapeDtypeStruct((N, OUT_PAD), out_dtype),
            grid_spec=pltpu.PrefetchScalarGridSpec(
                num_scalar_prefetch=0,
                grid=grid,
                in_specs=[
                    pl.BlockSpec((tile_n, H), lambda i, k: (i, 0)),   # x tile (streams)
                    w1_spec, b1_spec, w2_spec, b2_spec,
                ],
                out_specs=pl.BlockSpec((tile_n, OUT_PAD), lambda i, k: (i, 0)),
                scratch_shapes=[pltpu.VMEM((tile_n, OUT_PAD), jnp.float32)],
            ),
            compiler_params=pltpu.CompilerParams(
                dimension_semantics=("parallel", "arbitrary"),  # rows parallel, Hh reduction
                vmem_limit_bytes=vmem_limit,
            ),
            cost_estimate=pl.CostEstimate(
                flops=flops, transcendentals=0, bytes_accessed=bytes_accessed),
        )(x2d, w1, b1p, w2p, b2p)

    if _HAS_BUFFERED:
        try:
            out = run(True)
        except Exception:  # jax build rejects Buffered(1) -> default double-buffering
            out = run(False)
    else:
        out = run(False)

    return out[:, :OUT].reshape(*orig_shape[:-1], OUT)


def init_params(key, hidden_size, dtype=jnp.float32):
    """Deterministic synthetic init matching nn.Linear shapes, stored as (in, out)."""
    k1, k2, k3, k4 = jax.random.split(key, 4)
    hh = hidden_size // 2
    w1 = jax.random.normal(k1, (hidden_size, hh), dtype) * 0.1
    b1 = jax.random.normal(k2, (hh,), dtype) * 0.1
    w2 = jax.random.normal(k3, (hh, OUT), dtype) * 0.1
    b2 = jax.random.normal(k4, (OUT,), dtype) * 0.1
    return w1, b1, w2, b2


def _reference(x, w1, b1, w2, b2):
    with jax.default_matmul_precision("highest"):
        h = jnp.maximum(x @ w1 + b1, 0.0)
        return jnp.clip(h @ w2 + b2, 0.0, 1.0)


if __name__ == "__main__":
    key = jax.random.PRNGKey(0)
    k1, k2, k3, k4, k5, k6, k7, k8 = jax.random.split(key, 8)

    # 1) Small shape matching the module (batch=2, seq=8, hidden=32);
    #    resident weights, 2 row tiles (>= 2 grid steps rule).
    x = jax.random.normal(k1, (2, 8, 32), jnp.float32)
    p = init_params(k2, 32)
    out = jax.block_until_ready(bbox_decoder(x, *p))
    ref = _reference(x, *p)
    assert out.shape == (2, 8, 4)
    assert jnp.allclose(out, ref, atol=1e-4), "mismatch (small, resident weights)"

    # 2) N=600 tokens, tile_n=512: multi-step grid + partial last row block
    #    (no host-side padding of x).
    x2 = jax.random.normal(k3, (2, 300, 128), jnp.float32)
    p2 = init_params(k4, 128)
    out2 = jax.block_until_ready(bbox_decoder(x2, *p2))
    ref2 = _reference(x2, *p2)
    assert out2.shape == (2, 300, 4)
    assert jnp.allclose(out2, ref2, atol=1e-3), "mismatch (partial row tile)"

    # 3) Forced Hh striping (hidden=512 -> Hh=256, tile_hh=128 -> 2 stripes):
    #    exercises the accumulator / last-stripe finalize path.
    x3 = jax.random.normal(k5, (2, 32, 512), jnp.float32)
    p3 = init_params(k6, 512)
    out3 = jax.block_until_ready(bbox_decoder(x3, *p3, tile_hh=128))
    ref3 = _reference(x3, *p3)
    assert out3.shape == (2, 32, 4)
    assert jnp.allclose(out3, ref3, atol=2e-3), "mismatch (Hh-striped weights)"

    # 4) bf16 x/W1 stream (f32 accumulation) smoke test for the HBM-bound path.
    x4 = jax.random.normal(k7, (2, 16, 256), jnp.float32)
    p4 = init_params(k8, 256)
    out4 = jax.block_until_ready(bbox_decoder(x4, *p4, compute_dtype=jnp.bfloat16))
    ref4 = _reference(x4, *p4)
    assert out4.shape == (2, 16, 4)
    assert jnp.allclose(out4, ref4, atol=5e-2), "mismatch (bf16 compute path)"

    print("KERNEL_OK")
</pallas_src>

<mosaic_0001>
module attributes {stable_mosaic.version = 11 : i64} {
  func.func @_bbox_decoder_kernel(%arg0: i32, %arg1: i32, %arg2: memref<8x32xf32, #tpu.memory_space<vmem>>, %arg3: memref<32x16xf32, #tpu.memory_space<vmem>>, %arg4: memref<1x16xf32, #tpu.memory_space<vmem>>, %arg5: memref<16x128xf32, #tpu.memory_space<vmem>>, %arg6: memref<1x128xf32, #tpu.memory_space<vmem>>, %arg7: memref<8x128xf32, #tpu.memory_space<vmem>>, %arg8: memref<8x128xf32, #tpu.memory_space<vmem>>) attributes {dimension_semantics = [#tpu.dimension_semantics<parallel>, #tpu.dimension_semantics<arbitrary>], iteration_bounds = array<i64: 2, 1>, scalar_prefetch = 0 : i64, scratch_operands = 1 : i64, tpu.core_type = #tpu.core_type<tc>, window_params = [{transform_indices = @transform_0, window_bounds = array<i64: 8, 32>}, {pipeline_mode = #tpu.pipeline_mode<synchronous>, transform_indices = @transform_1, window_bounds = array<i64: 32, 16>}, {pipeline_mode = #tpu.pipeline_mode<synchronous>, transform_indices = @transform_2, window_bounds = array<i64: 1, 16>}, {pipeline_mode = #tpu.pipeline_mode<synchronous>, transform_indices = @transform_3, window_bounds = array<i64: 16, 128>}, {pipeline_mode = #tpu.pipeline_mode<synchronous>, transform_indices = @transform_4, window_bounds = array<i64: 1, 128>}, {transform_indices = @transform_5, window_bounds = array<i64: 8, 128>}]} {
    %c0_i32 = arith.constant 0 : i32
    %0 = arith.cmpi eq, %arg1, %c0_i32 : i32
    %1 = arith.extui %0 : i1 to i32
    %c0_i32_0 = arith.constant 0 : i32
    %2 = arith.cmpi ne, %1, %c0_i32_0 : i32
    scf.if %2 {
      %cst_16 = arith.constant 0.000000e+00 : f32
      %19 = vector.broadcast %cst_16 : f32 to vector<8x128xf32>
      %c0_17 = arith.constant 0 : index
      %c0_18 = arith.constant 0 : index
      %20 = vector.load %arg8[%c0_17, %c0_18] : memref<8x128xf32, #tpu.memory_space<vmem>>, vector<8x128xf32>
      tpu.vector_store %arg8[%c0_17, %c0_18], %19 {strides = array<i32>} : memref<8x128xf32, #tpu.memory_space<vmem>>, vector<8x128xf32>,
    } else {
    }
    %c0 = arith.constant 0 : index
    %c0_1 = arith.constant 0 : index
    %3 = vector.load %arg2[%c0, %c0_1] : memref<8x32xf32, #tpu.memory_space<vmem>>, vector<8x32xf32>
    %c0_2 = arith.constant 0 : index
    %c0_3 = arith.constant 0 : index
    %4 = vector.load %arg3[%c0_2, %c0_3] : memref<32x16xf32, #tpu.memory_space<vmem>>, vector<32x16xf32>
    %cst = arith.constant dense<0.000000e+00> : vector<8x16xf32>
    %5 = tpu.matmul %3, %4, %cst {dimension_numbers = #tpu.dot_dimension_numbers<[1], [0], [0], [1], [0, 0, 1, 1], [], []>} : vector<8x32xf32>, vector<32x16xf32>, vector<8x16xf32> -> vector<8x16xf32>
    %c0_4 = arith.constant 0 : index
    %c0_5 = arith.constant 0 : index
    %6 = vector.load %arg4[%c0_4, %c0_5] : memref<1x16xf32, #tpu.memory_space<vmem>>, vector<1x16xf32>
    %7 = vector.broadcast %6 : vector<1x16xf32> to vector<8x16xf32>
    %8 = arith.addf %5, %7 : vector<8x16xf32>
    %cst_6 = arith.constant 0.000000e+00 : f32
    %9 = vector.broadcast %cst_6 : f32 to vector<8x16xf32>
    %10 = arith.maximumf %8, %9 : vector<8x16xf32>
    %c0_7 = arith.constant 0 : index
    %c0_8 = arith.constant 0 : index
    %11 = vector.load %arg8[%c0_7, %c0_8] : memref<8x128xf32, #tpu.memory_space<vmem>>, vector<8x128xf32>
    %c0_9 = arith.constant 0 : index
    %c0_10 = arith.constant 0 : index
    %12 = vector.load %arg5[%c0_9, %c0_10] : memref<16x128xf32, #tpu.memory_space<vmem>>, vector<16x128xf32>
    %cst_11 = arith.constant dense<0.000000e+00> : vector<8x128xf32>
    %13 = tpu.matmul %10, %12, %cst_11 {dimension_numbers = #tpu.dot_dimension_numbers<[1], [0], [0], [1], [0, 0, 1, 1], [], []>} : vector<8x16xf32>, vector<16x128xf32>, vector<8x128xf32> -> vector<8x128xf32>
    %14 = arith.addf %11, %13 : vector<8x128xf32>
    %c0_12 = arith.constant 0 : index
    %c0_13 = arith.constant 0 : index
    %15 = vector.load %arg8[%c0_12, %c0_13] : memref<8x128xf32, #tpu.memory_space<vmem>>, vector<8x128xf32>
    tpu.vector_store %arg8[%c0_12, %c0_13], %14 {strides = array<i32>} : memref<8x128xf32, #tpu.memory_space<vmem>>, vector<8x128xf32>,
    %c0_i32_14 = arith.constant 0 : i32
    %16 = arith.cmpi eq, %arg1, %c0_i32_14 : i32
    %17 = arith.extui %16 : i1 to i32
    %c0_i32_15 = arith.constant 0 : i32
    %18 = arith.cmpi ne, %17, %c0_i32_15 : i32
    scf.if %18 {
      %c0_16 = arith.constant 0 : index
      %c0_17 = arith.constant 0 : index
      %19 = vector.load %arg8[%c0_16, %c0_17] : memref<8x128xf32, #tpu.memory_space<vmem>>, vector<8x128xf32>
      %c0_18 = arith.constant 0 : index
      %c0_19 = arith.constant 0 : index
      %20 = vector.load %arg6[%c0_18, %c0_19] : memref<1x128xf32, #tpu.memory_space<vmem>>, vector<1x128xf32>
      %21 = vector.broadcast %20 : vector<1x128xf32> to vector<8x128xf32>
      %22 = arith.addf %19, %21 : vector<8x128xf32>
      %cst_20 = arith.constant 0.000000e+00 : f32
      %cst_21 = arith.constant 1.000000e+00 : f32
      %23 = vector.broadcast %cst_20 : f32 to vector<8x128xf32>
      %24 = arith.maximumf %23, %22 : vector<8x128xf32>
      %25 = vector.broadcast %cst_21 : f32 to vector<8x128xf32>
      %26 = arith.minimumf %25, %24 : vector<8x128xf32>
      %c0_22 = arith.constant 0 : index
      %c0_23 = arith.constant 0 : index
      %27 = vector.load %arg7[%c0_22, %c0_23] : memref<8x128xf32, #tpu.memory_space<vmem>>, vector<8x128xf32>
      tpu.vector_store %arg7[%c0_22, %c0_23], %26 {strides = array<i32>} : memref<8x128xf32, #tpu.memory_space<vmem>>, vector<8x128xf32>,
    } else {
    }
    return
  }
  func.func @transform_0(%arg0: i32, %arg1: i32) -> (i32, i32) {
    %c0_i32 = arith.constant 0 : i32
    %c0_i32_0 = arith.constant 0 : i32
    return %arg0, %c0_i32 : i32, i32
  }
  func.func @transform_1(%arg0: i32, %arg1: i32) -> (i32, i32) {
    %c0_i32 = arith.constant 0 : i32
    %c0_i32_0 = arith.constant 0 : i32
    %c0_i32_1 = arith.constant 0 : i32
    return %c0_i32, %c0_i32_0 : i32, i32
  }
  func.func @transform_2(%arg0: i32, %arg1: i32) -> (i32, i32) {
    %c0_i32 = arith.constant 0 : i32
    %c0_i32_0 = arith.constant 0 : i32
    %c0_i32_1 = arith.constant 0 : i32
    return %c0_i32, %c0_i32_0 : i32, i32
  }
  func.func @transform_3(%arg0: i32, %arg1: i32) -> (i32, i32) {
    %c0_i32 = arith.constant 0 : i32
    %c0_i32_0 = arith.constant 0 : i32
    %c0_i32_1 = arith.constant 0 : i32
    return %c0_i32, %c0_i32_0 : i32, i32
  }
  func.func @transform_4(%arg0: i32, %arg1: i32) -> (i32, i32) {
    %c0_i32 = arith.constant 0 : i32
    %c0_i32_0 = arith.constant 0 : i32
    %c0_i32_1 = arith.constant 0 : i32
    return %c0_i32, %c0_i32_0 : i32, i32
  }
  func.func @transform_5(%arg0: i32, %arg1: i32) -> (i32, i32) {
    %c0_i32 = arith.constant 0 : i32
    %c0_i32_0 = arith.constant 0 : i32
    return %arg0, %c0_i32 : i32, i32
  }
}

module attributes {stable_mosaic.version = 11 : i64} {
  func.func @_bbox_decoder_kernel(%arg0: i32, %arg1: i32, %arg2: memref<8x32xf32, #tpu.memory_space<vmem>>, %arg3: memref<32x16xf32, #tpu.memory_space<vmem>>, %arg4: memref<1x16xf32, #tpu.memory_space<vmem>>, %arg5: memref<16x128xf32, #tpu.memory_space<vmem>>, %arg6: memref<1x128xf32, #tpu.memory_space<vmem>>, %arg7: memref<8x128xf32, #tpu.memory_space<vmem>>, %arg8: memref<8x128xf32, #tpu.memory_space<vmem>>) attributes {dimension_semantics = [#tpu.dimension_semantics<parallel>, #tpu.dimension_semantics<arbitrary>], iteration_bounds = array<i64: 2, 1>, scalar_prefetch = 0 : i64, scratch_operands = 1 : i64, tpu.core_type = #tpu.core_type<tc>, window_params = [{transform_indices = @transform_0, window_bounds = array<i64: 8, 32>}, {pipeline_mode = #tpu.pipeline_mode<synchronous>, transform_indices = @transform_1, window_bounds = array<i64: 32, 16>}, {pipeline_mode = #tpu.pipeline_mode<synchronous>, transform_indices = @transform_2, window_bounds = array<i64: 1, 16>}, {pipeline_mode = #tpu.pipeline_mode<synchronous>, transform_indices = @transform_3, window_bounds = array<i64: 16, 128>}, {pipeline_mode = #tpu.pipeline_mode<synchronous>, transform_indices = @transform_4, window_bounds = array<i64: 1, 128>}, {transform_indices = @transform_5, window_bounds = array<i64: 8, 128>}]} {
    %c0_i32 = arith.constant 0 : i32
    %0 = arith.cmpi eq, %arg1, %c0_i32 : i32
    %1 = arith.extui %0 : i1 to i32
    %c0_i32_0 = arith.constant 0 : i32
    %2 = arith.cmpi ne, %1, %c0_i32_0 : i32
    scf.if %2 {
      %cst_16 = arith.constant 0.000000e+00 : f32
      %19 = vector.broadcast %cst_16 : f32 to vector<8x128xf32>
      %c0_17 = arith.constant 0 : index
      %c0_18 = arith.constant 0 : index
      %20 = vector.load %arg8[%c0_17, %c0_18] : memref<8x128xf32, #tpu.memory_space<vmem>>, vector<8x128xf32>
      tpu.vector_store %arg8[%c0_17, %c0_18], %19 {strides = array<i32>} : memref<8x128xf32, #tpu.memory_space<vmem>>, vector<8x128xf32>,
    } else {
    }
    %c0 = arith.constant 0 : index
    %c0_1 = arith.constant 0 : index
    %3 = vector.load %arg2[%c0, %c0_1] : memref<8x32xf32, #tpu.memory_space<vmem>>, vector<8x32xf32>
    %c0_2 = arith.constant 0 : index
    %c0_3 = arith.constant 0 : index
    %4 = vector.load %arg3[%c0_2, %c0_3] : memref<32x16xf32, #tpu.memory_space<vmem>>, vector<32x16xf32>
    %cst = arith.constant dense<0.000000e+00> : vector<8x16xf32>
    %5 = tpu.matmul %3, %4, %cst {dimension_numbers = #tpu.dot_dimension_numbers<[1], [0], [0], [1], [0, 0, 1, 1], [], []>} : vector<8x32xf32>, vector<32x16xf32>, vector<8x16xf32> -> vector<8x16xf32>
    %c0_4 = arith.constant 0 : index
    %c0_5 = arith.constant 0 : index
    %6 = vector.load %arg4[%c0_4, %c0_5] : memref<1x16xf32, #tpu.memory_space<vmem>>, vector<1x16xf32>
    %7 = vector.broadcast %6 : vector<1x16xf32> to vector<8x16xf32>
    %8 = arith.addf %5, %7 : vector<8x16xf32>
    %cst_6 = arith.constant 0.000000e+00 : f32
    %9 = vector.broadcast %cst_6 : f32 to vector<8x16xf32>
    %10 = arith.maximumf %8, %9 : vector<8x16xf32>
    %c0_7 = arith.constant 0 : index
    %c0_8 = arith.constant 0 : index
    %11 = vector.load %arg8[%c0_7, %c0_8] : memref<8x128xf32, #tpu.memory_space<vmem>>, vector<8x128xf32>
    %c0_9 = arith.constant 0 : index
    %c0_10 = arith.constant 0 : index
    %12 = vector.load %arg5[%c0_9, %c0_10] : memref<16x128xf32, #tpu.memory_space<vmem>>, vector<16x128xf32>
    %cst_11 = arith.constant dense<0.000000e+00> : vector<8x128xf32>
    %13 = tpu.matmul %10, %12, %cst_11 {dimension_numbers = #tpu.dot_dimension_numbers<[1], [0], [0], [1], [0, 0, 1, 1], [], []>} : vector<8x16xf32>, vector<16x128xf32>, vector<8x128xf32> -> vector<8x128xf32>
    %14 = arith.addf %11, %13 : vector<8x128xf32>
    %c0_12 = arith.constant 0 : index
    %c0_13 = arith.constant 0 : index
    %15 = vector.load %arg8[%c0_12, %c0_13] : memref<8x128xf32, #tpu.memory_space<vmem>>, vector<8x128xf32>
    tpu.vector_store %arg8[%c0_12, %c0_13], %14 {strides = array<i32>} : memref<8x128xf32, #tpu.memory_space<vmem>>, vector<8x128xf32>,
    %c0_i32_14 = arith.constant 0 : i32
    %16 = arith.cmpi eq, %arg1, %c0_i32_14 : i32
    %17 = arith.extui %16 : i1 to i32
    %c0_i32_15 = arith.constant 0 : i32
    %18 = arith.cmpi ne, %17, %c0_i32_15 : i32
    scf.if %18 {
      %c0_16 = arith.constant 0 : index
      %c0_17 = arith.constant 0 : index
      %19 = vector.load %arg8[%c0_16, %c0_17] : memref<8x128xf32, #tpu.memory_space<vmem>>, vector<8x128xf32>
      %c0_18 = arith.constant 0 : index
      %c0_19 = arith.constant 0 : index
      %20 = vector.load %arg6[%c0_18, %c0_19] : memref<1x128xf32, #tpu.memory_space<vmem>>, vector<1x128xf32>
      %21 = vector.broadcast %20 : vector<1x128xf32> to vector<8x128xf32>
      %22 = arith.addf %19, %21 : vector<8x128xf32>
      %cst_20 = arith.constant 0.000000e+00 : f32
      %cst_21 = arith.constant 1.000000e+00 : f32
      %23 = vector.broadcast %cst_20 : f32 to vector<8x128xf32>
      %24 = arith.maximumf %23, %22 : vector<8x128xf32>
      %25 = vector.broadcast %cst_21 : f32 to vector<8x128xf32>
      %26 = arith.minimumf %25, %24 : vector<8x128xf32>
      %c0_22 = arith.constant 0 : index
      %c0_23 = arith.constant 0 : index
      %27 = vector.load %arg7[%c0_22, %c0_23] : memref<8x128xf32, #tpu.memory_space<vmem>>, vector<8x128xf32>
      tpu.vector_store %arg7[%c0_22, %c0_23], %26 {strides = array<i32>} : memref<8x128xf32, #tpu.memory_space<vmem>>, vector<8x128xf32>,
    } else {
    }
    return
  }
  func.func @transform_0(%arg0: i32, %arg1: i32) -> (i32, i32) {
    %c0_i32 = arith.constant 0 : i32
    %c0_i32_0 = arith.constant 0 : i32
    return %arg0, %c0_i32 : i32, i32
  }
  func.func @transform_1(%arg0: i32, %arg1: i32) -> (i32, i32) {
    %c0_i32 = arith.constant 0 : i32
    %c0_i32_0 = arith.constant 0 : i32
    %c0_i32_1 = arith.constant 0 : i32
    return %c0_i32, %c0_i32_0 : i32, i32
  }
  func.func @transform_2(%arg0: i32, %arg1: i32) -> (i32, i32) {
    %c0_i32 = arith.constant 0 : i32
    %c0_i32_0 = arith.constant 0 : i32
    %c0_i32_1 = arith.constant 0 : i32
    return %c0_i32, %c0_i32_0 : i32, i32
  }
  func.func @transform_3(%arg0: i32, %arg1: i32) -> (i32, i32) {
    %c0_i32 = arith.constant 0 : i32
    %c0_i32_0 = arith.constant 0 : i32
    %c0_i32_1 = arith.constant 0 : i32
    return %c0_i32, %c0_i32_0 : i32, i32
  }
  func.func @transform_4(%arg0: i32, %arg1: i32) -> (i32, i32) {
    %c0_i32 = arith.constant 0 : i32
    %c0_i32_0 = arith.constant 0 : i32
    %c0_i32_1 = arith.constant 0 : i32
    return %c0_i32, %c0_i32_0 : i32, i32
  }
  func.func @transform_5(%arg0: i32, %arg1: i32) -> (i32, i32) {
    %c0_i32 = arith.constant 0 : i32
    %c0_i32_0 = arith.constant 0 : i32
    return %arg0, %c0_i32 : i32, i32
  }
}

</mosaic_0001>

<llo_original>
// kernel: tpu_custom_call.1
$region0: #{tpu_custom_call.1}
  #allocation0 [shape = 'u32[]', space=smem, size = 0x4, offset = 0x4, fixed_abs, tag = 'smem constant byte address 0x4 - core index']
  #allocation1 [shape = 'u32[72,128]{1,0:T(1,128)}', space=vmem, size = 0x9000, scoped, tag = 'internal scratch']
  #allocation2 [shape = 'f32[8,128]{1,0:T(8,128)}', space=vmem, size = 0x1000, scoped, tag = 'scratch operand']
  %s0 = inlined_call_operand.vmem [shape: f32[16,32], index: 0, kind: input, shape index: {}]
  %s1 = inlined_call_operand.vmem [shape: f32[32,16], index: 1, kind: input, shape index: {}]
  %s2 = inlined_call_operand.vmem [shape: f32[1,16], index: 2, kind: input, shape index: {}]
  %s3 = inlined_call_operand.vmem [shape: f32[16,128], index: 3, kind: input, shape index: {}]
  %s4 = inlined_call_operand.vmem [shape: f32[1,128], index: 4, kind: input, shape index: {}]
  %s5 = inlined_call_operand.hbm [shape: f32[16,128], index: 5, kind: output, shape index: {}]
  %s6 = sld [smem:[#allocation0]]
  $region61: #{tpu_custom_call.1} parent=0
    _
  %s8 = ssub.s32 1, %s6
  %s9 = scalar_select 0, %s8, %s6
  $region1: #{tpu_custom_call.1} parent=0
    #allocation3 [shape = 'u8[8192]{0}', space=vmem, size = 0x2000, scoped, tag = 'output window, operand 0']
    #allocation4 [shape = 's32[2]{0}', space=sflag, size = 0x8, scoped, tag = 'scoped memory for tpu_custom_call.1']
    %10 = vsyncpa [#allocation4], 0
    %s11 = scalar_lea.sflag [#allocation4], 1
    %12 = vsyncpa %s11, 0
    loop: start=0, step=1, limit=4
    $region2: #{tpu_custom_call.1} parent=1 // loop_pre_header
      _
    $region3: #{tpu_custom_call.1} parent=1 // loop_header
      %s14 = sphi 0, %s18
      %p15 = scmp.ge.s32.totalorder %s14, 4
      %s21 = sphi 0, %s33
      %s22 = sphi 0, %s29
      %s23 = sphi 0, %s21
      %s24 = sphi 0, %s22
      %s25 = sphi 0, %s23
      %s26 = sphi 0, %s24
      %s36 = sphi 0, %s38
      %s39 = sphi 0, %s36
      %s40 = sphi 0, %s39
      %s56 = sphi 0, %s40
      %s60 = sphi 0, %s60
      %s62 = sphi 0, %s60
      %s63 = sphi 0, %s62
      %s77 = sphi 0, %s63
      %s81 = sphi 0, %s81
      %s83 = sphi 0, %s81
      %s84 = sphi 0, %s83
      %s98 = sphi 0, %s84
      %s102 = sphi 0, %s102
      %s104 = sphi 0, %s102
      %s105 = sphi 0, %s104
      %s119 = sphi 0, %s105
      %s123 = sphi 0, %s123
      %s125 = sphi 0, %s123
      %s126 = sphi 0, %s125
      %s140 = sphi 0, %s126
      %s146 = sphi 0, %s148
      %s149 = sphi 0, %s146
      %s150 = sphi 0, %s149
      %s166 = sphi 0, %s150
    $region4: #{tpu_custom_call.1} parent=1 // loop_header_branch
      %17 = sbr.rel (%p15) target = $region8
    $region5: #{tpu_custom_call.1} parent=1 // loop_body
      %s19 = ssub.s32 %s14, 1
      %s20 = ssub.s32 %s14, 2
      %s27 = sadd.s32 1, %s22
      %p28 = scmp.ge.s32.totalorder %s27, 1
      %s29 = scalar_select %p28, 0, %s27
      %s30 = sadd.s32 1, %s21
      %s31 = scalar_select %p28, %s30, %s21
      %p32 = scmp.ge.s32.totalorder %s31, 2
      %s33 = scalar_select %p32, 0, %s31
      %s34 = ssub.s32 %s21, %s33
      %p35 = scmp.eq.s32.totalorder %s34, 0
      %s37 = sadd.s32 %s36, 1
      %s38 = scalar_select %p35, %s36, %s37
      %p41 = pneg %p35
      %p42 = scmp.eq.s32.totalorder %s14, 1
      %p43 = por %p41, %p42
      %p44 = scmp.ne.s32.totalorder %s36, %s39
      %p45 = scmp.eq.s32.totalorder %s14, 0
      %p46 = por %p44, %p45
      %p47 = scmp.ne.s32.totalorder %s36, %s39
      %p48 = scmp.eq.s32.totalorder %s19, 1
      %p49 = por %p47, %p48
      %p50 = scmp.ne.s32.totalorder %s39, %s40
      %p51 = scmp.eq.s32.totalorder %s19, 0
      %p52 = por %p50, %p51
      %p53 = scmp.ne.s32.totalorder %s39, %s40
      %p54 = scmp.eq.s32.totalorder %s20, 1
      %p55 = por %p53, %p54
      %p57 = scmp.ne.s32.totalorder %s40, %s56
      %p58 = scmp.eq.s32.totalorder %s20, 0
      %p59 = por %p57, %p58
      %s61 = sadd.s32 %s60, 1
      %p64 = scmp.eq.s32.totalorder %s14, 1
      %p65 = scmp.ne.s32.totalorder %s60, %s62
      %p66 = scmp.eq.s32.totalorder %s14, 0
      %p67 = por %p65, %p66
      %p68 = scmp.ne.s32.totalorder %s60, %s62
      %p69 = scmp.eq.s32.totalorder %s19, 1
      %p70 = por %p68, %p69
      %p71 = scmp.ne.s32.totalorder %s62, %s63
      %p72 = scmp.eq.s32.totalorder %s19, 0
      %p73 = por %p71, %p72
      %p74 = scmp.ne.s32.totalorder %s62, %s63
      %p75 = scmp.eq.s32.totalorder %s20, 1
      %p76 = por %p74, %p75
      %p78 = scmp.ne.s32.totalorder %s63, %s77
      %p79 = scmp.eq.s32.totalorder %s20, 0
      %p80 = por %p78, %p79
      %s82 = sadd.s32 %s81, 1
      %p85 = scmp.eq.s32.totalorder %s14, 1
      %p86 = scmp.ne.s32.totalorder %s81, %s83
      %p87 = scmp.eq.s32.totalorder %s14, 0
      %p88 = por %p86, %p87
      %p89 = scmp.ne.s32.totalorder %s81, %s83
      %p90 = scmp.eq.s32.totalorder %s19, 1
      %p91 = por %p89, %p90
      %p92 = scmp.ne.s32.totalorder %s83, %s84
      %p93 = scmp.eq.s32.totalorder %s19, 0
      %p94 = por %p92, %p93
      %p95 = scmp.ne.s32.totalorder %s83, %s84
      %p96 = scmp.eq.s32.totalorder %s20, 1
      %p97 = por %p95, %p96
      %p99 = scmp.ne.s32.totalorder %s84, %s98
      %p100 = scmp.eq.s32.totalorder %s20, 0
      %p101 = por %p99, %p100
      %s103 = sadd.s32 %s102, 1
      %p106 = scmp.eq.s32.totalorder %s14, 1
      %p107 = scmp.ne.s32.totalorder %s102, %s104
      %p108 = scmp.eq.s32.totalorder %s14, 0
      %p109 = por %p107, %p108
      %p110 = scmp.ne.s32.totalorder %s102, %s104
      %p111 = scmp.eq.s32.totalorder %s19, 1
      %p112 = por %p110, %p111
      %p113 = scmp.ne.s32.totalorder %s104, %s105
      %p114 = scmp.eq.s32.totalorder %s19, 0
      %p115 = por %p113, %p114
      %p116 = scmp.ne.s32.totalorder %s104, %s105
      %p117 = scmp.eq.s32.totalorder %s20, 1
      %p118 = por %p116, %p117
      %p120 = scmp.ne.s32.totalorder %s105, %s119
      %p121 = scmp.eq.s32.totalorder %s20, 0
      %p122 = por %p120, %p121
      %s124 = sadd.s32 %s123, 1
      %p127 = scmp.eq.s32.totalorder %s14, 1
      %p128 = scmp.ne.s32.totalorder %s123, %s125
      %p129 = scmp.eq.s32.totalorder %s14, 0
      %p130 = por %p128, %p129
      %p131 = scmp.ne.s32.totalorder %s123, %s125
      %p132 = scmp.eq.s32.totalorder %s19, 1
      %p133 = por %p131, %p132
      %p134 = scmp.ne.s32.totalorder %s125, %s126
      %p135 = scmp.eq.s32.totalorder %s19, 0
      %p136 = por %p134, %p135
      %p137 = scmp.ne.s32.totalorder %s125, %s126
      %p138 = scmp.eq.s32.totalorder %s20, 1
      %p139 = por %p137, %p138
      %p141 = scmp.ne.s32.totalorder %s126, %s140
      %p142 = scmp.eq.s32.totalorder %s20, 0
      %p143 = por %p141, %p142
      %s144 = ssub.s32 %s21, %s33
      %p145 = scmp.eq.s32.totalorder %s144, 0
      %s147 = sadd.s32 %s146, 1
      %s148 = scalar_select %p145, %s146, %s147
      %p151 = pneg %p145
      %p152 = scmp.eq.s32.totalorder %s14, 1
      %p153 = por %p151, %p152
      %p154 = scmp.ne.s32.totalorder %s146, %s149
      %p155 = scmp.eq.s32.totalorder %s14, 0
      %p156 = por %p154, %p155
      %p157 = scmp.ne.s32.totalorder %s146, %s149
      %p158 = scmp.eq.s32.totalorder %s19, 1
      %p159 = por %p157, %p158
      %p160 = scmp.ne.s32.totalorder %s149, %s150
      %p161 = scmp.eq.s32.totalorder %s19, 0
      %p162 = por %p160, %p161
      %p163 = scmp.ne.s32.totalorder %s149, %s150
      %p164 = scmp.eq.s32.totalorder %s20, 1
      %p165 = por %p163, %p164
      %p167 = scmp.ne.s32.totalorder %s150, %s166
      %p168 = scmp.eq.s32.totalorder %s20, 0
      %p169 = por %p167, %p168
      %p170 = scmp.le.s32.totalorder 1, %s14
      %p171 = scmp.lt.s32.totalorder %s14, 3
      %p172 = pnand %p170, %p171
      %p173 = pneg %p172
      // Predicated region
      $region9: #{tpu_custom_call.1} parent=5 // pred_check
        _
      $region10: #{tpu_custom_call.1} parent=5 // pred_check_branch
        %175 = sbr.rel (%p172) target = $region12
      $region11: #{tpu_custom_call.1} parent=5 // pred_region
        %s176 = ssub.s32 %s14, 1
        // Predicated region
        $region13: #{tpu_custom_call.1} parent=11 // pred_check
          %p177 = pneg %p73
        $region14: #{tpu_custom_call.1} parent=11 // pred_check_branch
          %179 = sbr.rel (%p177) target = $region16
        $region15: #{tpu_custom_call.1} parent=11 // pred_region
          _
        $region16: #{tpu_custom_call.1} parent=11 // pred_fallthru
          _
        // Predicated region
        $region17: #{tpu_custom_call.1} parent=11 // pred_check
          %p180 = pneg %p94
        $region18: #{tpu_custom_call.1} parent=11 // pred_check_branch
          %182 = sbr.rel (%p180) target = $region20
        $region19: #{tpu_custom_call.1} parent=11 // pred_region
          _
        $region20: #{tpu_custom_call.1} parent=11 // pred_fallthru
          _
        // Predicated region
        $region21: #{tpu_custom_call.1} parent=11 // pred_check
          %p183 = pneg %p115
        $region22: #{tpu_custom_call.1} parent=11 // pred_check_branch
          %185 = sbr.rel (%p183) target = $region24
        $region23: #{tpu_custom_call.1} parent=11 // pred_region
          _
        $region24: #{tpu_custom_call.1} parent=11 // pred_fallthru
          _
        // Predicated region
        $region25: #{tpu_custom_call.1} parent=11 // pred_check
          %p186 = pneg %p136
        $region26: #{tpu_custom_call.1} parent=11 // pred_check_branch
          %188 = sbr.rel (%p186) target = $region28
        $region27: #{tpu_custom_call.1} parent=11 // pred_region
          _
        $region28: #{tpu_custom_call.1} parent=11 // pred_fallthru
          _
      $region12: #{tpu_custom_call.1} parent=5 // pred_fallthru
        _
      %p189 = scmp.lt.s32.totalorder %s14, 2
      // Predicated region
      $region29: #{tpu_custom_call.1} parent=5 // pred_check
        %p190 = pneg %p189
      $region30: #{tpu_custom_call.1} parent=5 // pred_check_branch
        %192 = sbr.rel (%p190) target = $region32
      $region31: #{tpu_custom_call.1} parent=5 // pred_region
        // Predicated region
        $region33: #{tpu_custom_call.1} parent=31 // pred_check
          %p193 = pneg %p46
        $region34: #{tpu_custom_call.1} parent=31 // pred_check_branch
          %195 = sbr.rel (%p193) target = $region36
        $region35: #{tpu_custom_call.1} parent=31 // pred_region
          %p196 = scmp.lt.s32.totalorder %s21, 1
          %s197 = scalar_select %p196, %s21, 1
          %s198 = smul.addr %s197, 8
          %s199 = scalar_lea.vmem %s0, %s198
        $region36: #{tpu_custom_call.1} parent=31 // pred_fallthru
          _
      $region32: #{tpu_custom_call.1} parent=5 // pred_fallthru
        _
      %p200 = scmp.le.s32.totalorder 1, %s14
      %p201 = scmp.lt.s32.totalorder %s14, 3
      %p202 = pnand %p200, %p201
      %p203 = pneg %p202
      // Predicated region
      $region37: #{tpu_custom_call.1} parent=5 // pred_check
        _
      $region38: #{tpu_custom_call.1} parent=5 // pred_check_branch
        %205 = sbr.rel (%p202) target = $region40
      $region39: #{tpu_custom_call.1} parent=5 // pred_region
        %s206 = ssub.s32 %s14, 1
        %p207 = scmp.lt.s32.totalorder %s23, 1
        %s208 = scalar_select %p207, %s23, 1
        %s209 = smul.addr %s208, 8
        %s210 = scalar_lea.vmem %s0, %s209
        %p211 = pneg %p52
        %p212 = pneg %p49
        %p213 = pneg %p73
        %p214 = pneg %p70
        %p215 = pneg %p94
        %p216 = pneg %p91
        %p217 = pneg %p115
        %p218 = pneg %p112
        %p219 = pneg %p136
        %p220 = pneg %p133
        %p221 = pneg %p162
        %p222 = pneg %p159
        %s223 = sand.u32 %s149, 1
        %s224 = scalar_lea.sflag [#allocation4], %s223
        %s225 = sand.u32 %s149, 1
        %s226 = smul.addr %s225, 8
        %s227 = scalar_lea.vmem [#allocation3], %s226
        %p228 = scmp.lt.s32.totalorder %s23, 1
        %s229 = scalar_select %p228, %s23, 1
        %s230 = smul.addr %s229, 8
        %s231 = scalar_lea.vmem %s0, %s230
        %p232 = scmp.eq.s32.totalorder %s24, 0
        // Predicated region
        $region41: #{tpu_custom_call.1} parent=39 // pred_check
          %p233 = pneg %p232
        $region42: #{tpu_custom_call.1} parent=39 // pred_check_branch
          %235 = sbr.rel (%p233) target = $region44
        $region43: #{tpu_custom_call.1} parent=39 // pred_region
          %236 = vst [vmem:[#allocation2] sm:$0xff] 0.0
        $region44: #{tpu_custom_call.1} parent=39 // pred_fallthru
          _
        %v237 = vld [vmem:[%s231] sm:$0xff]
        %v238 = vld [vmem:[%s1] sm:$0xff]
        %v239 = vld [vmem:[%s1 + $0x8] sm:$0xff]
        %v240 = vld [vmem:[%s1 + $0x10] sm:$0xff]
        %v241 = vld [vmem:[%s1 + $0x18] sm:$0xff]
        %v242 = vld [vmem:[%s2] sm:$0x1]
        %v244 = vperm.slane %v242, 0
        %vm246 = vcmask 261120
        %v248 = vsel %vm246, %v237, 0
        %250 = vmatpush.msra.mxu0 0.0
        %251 = vmatpush.msra.mxu0 0.0
        %252 = vmatpush.msra.mxu0 0.0
        %253 = vmatpush.msra.mxu0 0.0
        %254 = vmatpush.msra.mxu0 0.0
        %255 = vmatpush.msra.mxu0 0.0
        %256 = vmatpush.msra.mxu0 0.0
        %257 = vmatpush.msra.mxu0 0.0
        %258 = vmatpush.msra.mxu0 0.0
        %259 = vmatpush.msra.mxu0 0.0
        %260 = vmatpush.msra.mxu0 0.0
        %261 = vmatpush.msra.mxu0 0.0
        %262 = vmatpush.msra.mxu0 %v241
        %263 = vmatpush.msra.mxu0 %v240
        %264 = vmatpush.msra.mxu0 %v239
        %265 = vmatpush.msra.mxu0 %v238
        %266 = vmatmul.f32.gmra.mxu0 %v248
        %v267 = vpop.f32.mrf.mxu0
        %v268 = vadd.f32 %v244, %v267
        %269 = vdwg.mxu0
        %v270 = vmax.f32 %v268, 0.0
        %v271 = vld [vmem:[#allocation2] sm:$0xff]
        %v272 = vld [vmem:[%s3] sm:$0xff]
        %v273 = vld [vmem:[%s3 + $0x8] sm:$0xff]
        %vm274 = vcmask 130048
        %v276 = vsel %vm274, %v270, 0
        %278 = vmatpush.msra.mxu0 0.0
        %279 = vmatpush.msra.mxu0 0.0
        %280 = vmatpush.msra.mxu0 0.0
        %281 = vmatpush.msra.mxu0 0.0
        %282 = vmatpush.msra.mxu0 0.0
        %283 = vmatpush.msra.mxu0 0.0
        %284 = vmatpush.msra.mxu0 0.0
        %285 = vmatpush.msra.mxu0 0.0
        %286 = vmatpush.msra.mxu0 0.0
        %287 = vmatpush.msra.mxu0 0.0
        %288 = vmatpush.msra.mxu0 0.0
        %289 = vmatpush.msra.mxu0 0.0
        %290 = vmatpush.msra.mxu0 0.0
        %291 = vmatpush.msra.mxu0 0.0
        %292 = vmatpush.msra.mxu0 %v273
        %293 = vmatpush.msra.mxu0 %v272
        %294 = vmatmul.f32.gmra.mxu0 %v276
        %v295 = vpop.f32.mrf.mxu0
        %v296 = vadd.f32 0.0, %v295
        %297 = vdwg.mxu0
        %v298 = vadd.f32 %v271, %v296
        %299 = vst [vmem:[#allocation2] sm:$0xff] %v298
        // Predicated region
        $region45: #{tpu_custom_call.1} parent=39 // pred_check
          %p300 = pneg %p232
        $region46: #{tpu_custom_call.1} parent=39 // pred_check_branch
          %302 = sbr.rel (%p300) target = $region48
        $region47: #{tpu_custom_call.1} parent=39 // pred_region
          %v303 = vld [vmem:[#allocation2] sm:$0xff]
          %v304 = vld [vmem:[%s4] sm:$0x1]
          %v306 = vperm.slane %v304, 0
          %v308 = vadd.f32 %v303, %v306
          %v309 = vmax.f32 %v308, 0.0
          %v310 = vmin.f32 %v309, 1.0
          %311 = vst [vmem:[%s227] sm:$0xff] %v310
        $region48: #{tpu_custom_call.1} parent=39 // pred_fallthru
          _
        %s312 = sand.u32 %s149, 1
        %s313 = scalar_lea.sflag [#allocation4], %s312
        %s314 = sand.u32 %s149, 1
        %s315 = smul.addr %s314, 8
        %s316 = scalar_lea.vmem [#allocation3], %s315
        // Predicated region
        $region49: #{tpu_custom_call.1} parent=39 // pred_check
          %p317 = pneg %p159
        $region50: #{tpu_custom_call.1} parent=39 // pred_check_branch
          %319 = sbr.rel (%p317) target = $region52
        $region51: #{tpu_custom_call.1} parent=39 // pred_region
          %321 = vsyncadd %s313, 0
          %s322 = smul.addr %s23, 8
          %s323 = scalar_lea.hbm %s5, %s322
          %s325 = sshll.u32 %s316, 4
          %s326 = int_to_ptr.vmem [resolvable:$true] %s325
          %s327 = sshll.u32 %s323, 4
          %s328 = int_to_ptr.hbm [resolvable:$true] %s327
          %330 = dma.vmem_to_hbm [thread:$0]  %s326, 128, %s328, %s313
        $region52: #{tpu_custom_call.1} parent=39 // pred_fallthru
          _
      $region40: #{tpu_custom_call.1} parent=5 // pred_fallthru
        _
      %p331 = scmp.le.s32.totalorder 2, %s14
      // Predicated region
      $region53: #{tpu_custom_call.1} parent=5 // pred_check
        %p332 = pneg %p331
      $region54: #{tpu_custom_call.1} parent=5 // pred_check_branch
        %334 = sbr.rel (%p332) target = $region56
      $region55: #{tpu_custom_call.1} parent=5 // pred_region
        %s335 = ssub.s32 %s14, 2
        // Predicated region
        $region57: #{tpu_custom_call.1} parent=55 // pred_check
          %p336 = pneg %p165
        $region58: #{tpu_custom_call.1} parent=55 // pred_check_branch
          %338 = sbr.rel (%p336) target = $region60
        $region59: #{tpu_custom_call.1} parent=55 // pred_region
          %s339 = sand.u32 %s150, 1
          %s340 = scalar_lea.sflag [#allocation4], %s339
          %s341 = sand.u32 %s150, 1
          %s342 = smul.addr %s341, 8
          %s343 = scalar_lea.vmem [#allocation3], %s342
          %345 = dma.done %s340, 128
        $region60: #{tpu_custom_call.1} parent=55 // pred_fallthru
          _
      $region56: #{tpu_custom_call.1} parent=5 // pred_fallthru
        _
    $region6: #{tpu_custom_call.1} parent=1 // loop_footer
      %s18 = sadd.s32 1, %s14
    $region7: #{tpu_custom_call.1} parent=1 // loop_footer_branch
      %13 = sbr.rel target = $region3
    $region8: #{tpu_custom_call.1} parent=1 // loop_exit
      _
    %346 = vsyncpa [#allocation4], 1
    %s347 = scalar_lea.sflag [#allocation4], 1
    %348 = vsyncpa %s347, 1

// kernel: tpu_custom_call.1
$region0: #{tpu_custom_call.1}
  #allocation0 [shape = 'u32[]', space=smem, size = 0x4, offset = 0x4, fixed_abs, tag = 'smem constant byte address 0x4 - core index']
  #allocation1 [shape = 'u32[72,128]{1,0:T(1,128)}', space=vmem, size = 0x9000, scoped, tag = 'internal scratch']
  #allocation2 [shape = 'f32[8,128]{1,0:T(8,128)}', space=vmem, size = 0x1000, scoped, tag = 'scratch operand']
  %s0 = inlined_call_operand.vmem [shape: f32[16,32], index: 0, kind: input, shape index: {}]
  %s1 = inlined_call_operand.vmem [shape: f32[32,16], index: 1, kind: input, shape index: {}]
  %s2 = inlined_call_operand.vmem [shape: f32[1,16], index: 2, kind: input, shape index: {}]
  %s3 = inlined_call_operand.vmem [shape: f32[16,128], index: 3, kind: input, shape index: {}]
  %s4 = inlined_call_operand.vmem [shape: f32[1,128], index: 4, kind: input, shape index: {}]
  %s5 = inlined_call_operand.hbm [shape: f32[16,128], index: 5, kind: output, shape index: {}]
  %s6 = sld [smem:[#allocation0]]
  $region61: #{tpu_custom_call.1} parent=0
    _
  %s8 = ssub.s32 1, %s6
  %s9 = scalar_select 0, %s8, %s6
  $region1: #{tpu_custom_call.1} parent=0
    #allocation3 [shape = 'u8[8192]{0}', space=vmem, size = 0x2000, scoped, tag = 'output window, operand 0']
    #allocation4 [shape = 's32[2]{0}', space=sflag, size = 0x8, scoped, tag = 'scoped memory for tpu_custom_call.1']
    %10 = vsyncpa [#allocation4], 0
    %s11 = scalar_lea.sflag [#allocation4], 1
    %12 = vsyncpa %s11, 0
    loop: start=0, step=1, limit=4
    $region2: #{tpu_custom_call.1} parent=1 // loop_pre_header
      _
    $region3: #{tpu_custom_call.1} parent=1 // loop_header
      %s14 = sphi 0, %s18
      %p15 = scmp.ge.s32.totalorder %s14, 4
      %s21 = sphi 0, %s33
      %s22 = sphi 0, %s29
      %s23 = sphi 0, %s21
      %s24 = sphi 0, %s22
      %s25 = sphi 0, %s23
      %s26 = sphi 0, %s24
      %s36 = sphi 0, %s38
      %s39 = sphi 0, %s36
      %s40 = sphi 0, %s39
      %s56 = sphi 0, %s40
      %s60 = sphi 0, %s60
      %s62 = sphi 0, %s60
      %s63 = sphi 0, %s62
      %s77 = sphi 0, %s63
      %s81 = sphi 0, %s81
      %s83 = sphi 0, %s81
      %s84 = sphi 0, %s83
      %s98 = sphi 0, %s84
      %s102 = sphi 0, %s102
      %s104 = sphi 0, %s102
      %s105 = sphi 0, %s104
      %s119 = sphi 0, %s105
      %s123 = sphi 0, %s123
      %s125 = sphi 0, %s123
      %s126 = sphi 0, %s125
      %s140 = sphi 0, %s126
      %s146 = sphi 0, %s148
      %s149 = sphi 0, %s146
      %s150 = sphi 0, %s149
      %s166 = sphi 0, %s150
    $region4: #{tpu_custom_call.1} parent=1 // loop_header_branch
      %17 = sbr.rel (%p15) target = $region8
    $region5: #{tpu_custom_call.1} parent=1 // loop_body
      %s19 = ssub.s32 %s14, 1
      %s20 = ssub.s32 %s14, 2
      %s27 = sadd.s32 1, %s22
      %p28 = scmp.ge.s32.totalorder %s27, 1
      %s29 = scalar_select %p28, 0, %s27
      %s30 = sadd.s32 1, %s21
      %s31 = scalar_select %p28, %s30, %s21
      %p32 = scmp.ge.s32.totalorder %s31, 2
      %s33 = scalar_select %p32, 0, %s31
      %s34 = ssub.s32 %s21, %s33
      %p35 = scmp.eq.s32.totalorder %s34, 0
      %s37 = sadd.s32 %s36, 1
      %s38 = scalar_select %p35, %s36, %s37
      %p41 = pneg %p35
      %p42 = scmp.eq.s32.totalorder %s14, 1
      %p43 = por %p41, %p42
      %p44 = scmp.ne.s32.totalorder %s36, %s39
      %p45 = scmp.eq.s32.totalorder %s14, 0
      %p46 = por %p44, %p45
      %p47 = scmp.ne.s32.totalorder %s36, %s39
      %p48 = scmp.eq.s32.totalorder %s19, 1
      %p49 = por %p47, %p48
      %p50 = scmp.ne.s32.totalorder %s39, %s40
      %p51 = scmp.eq.s32.totalorder %s19, 0
      %p52 = por %p50, %p51
      %p53 = scmp.ne.s32.totalorder %s39, %s40
      %p54 = scmp.eq.s32.totalorder %s20, 1
      %p55 = por %p53, %p54
      %p57 = scmp.ne.s32.totalorder %s40, %s56
      %p58 = scmp.eq.s32.totalorder %s20, 0
      %p59 = por %p57, %p58
      %s61 = sadd.s32 %s60, 1
      %p64 = scmp.eq.s32.totalorder %s14, 1
      %p65 = scmp.ne.s32.totalorder %s60, %s62
      %p66 = scmp.eq.s32.totalorder %s14, 0
      %p67 = por %p65, %p66
      %p68 = scmp.ne.s32.totalorder %s60, %s62
      %p69 = scmp.eq.s32.totalorder %s19, 1
      %p70 = por %p68, %p69
      %p71 = scmp.ne.s32.totalorder %s62, %s63
      %p72 = scmp.eq.s32.totalorder %s19, 0
      %p73 = por %p71, %p72
      %p74 = scmp.ne.s32.totalorder %s62, %s63
      %p75 = scmp.eq.s32.totalorder %s20, 1
      %p76 = por %p74, %p75
      %p78 = scmp.ne.s32.totalorder %s63, %s77
      %p79 = scmp.eq.s32.totalorder %s20, 0
      %p80 = por %p78, %p79
      %s82 = sadd.s32 %s81, 1
      %p85 = scmp.eq.s32.totalorder %s14, 1
      %p86 = scmp.ne.s32.totalorder %s81, %s83
      %p87 = scmp.eq.s32.totalorder %s14, 0
      %p88 = por %p86, %p87
      %p89 = scmp.ne.s32.totalorder %s81, %s83
      %p90 = scmp.eq.s32.totalorder %s19, 1
      %p91 = por %p89, %p90
      %p92 = scmp.ne.s32.totalorder %s83, %s84
      %p93 = scmp.eq.s32.totalorder %s19, 0
      %p94 = por %p92, %p93
      %p95 = scmp.ne.s32.totalorder %s83, %s84
      %p96 = scmp.eq.s32.totalorder %s20, 1
      %p97 = por %p95, %p96
      %p99 = scmp.ne.s32.totalorder %s84, %s98
      %p100 = scmp.eq.s32.totalorder %s20, 0
      %p101 = por %p99, %p100
      %s103 = sadd.s32 %s102, 1
      %p106 = scmp.eq.s32.totalorder %s14, 1
      %p107 = scmp.ne.s32.totalorder %s102, %s104
      %p108 = scmp.eq.s32.totalorder %s14, 0
      %p109 = por %p107, %p108
      %p110 = scmp.ne.s32.totalorder %s102, %s104
      %p111 = scmp.eq.s32.totalorder %s19, 1
      %p112 = por %p110, %p111
      %p113 = scmp.ne.s32.totalorder %s104, %s105
      %p114 = scmp.eq.s32.totalorder %s19, 0
      %p115 = por %p113, %p114
      %p116 = scmp.ne.s32.totalorder %s104, %s105
      %p117 = scmp.eq.s32.totalorder %s20, 1
      %p118 = por %p116, %p117
      %p120 = scmp.ne.s32.totalorder %s105, %s119
      %p121 = scmp.eq.s32.totalorder %s20, 0
      %p122 = por %p120, %p121
      %s124 = sadd.s32 %s123, 1
      %p127 = scmp.eq.s32.totalorder %s14, 1
      %p128 = scmp.ne.s32.totalorder %s123, %s125
      %p129 = scmp.eq.s32.totalorder %s14, 0
      %p130 = por %p128, %p129
      %p131 = scmp.ne.s32.totalorder %s123, %s125
      %p132 = scmp.eq.s32.totalorder %s19, 1
      %p133 = por %p131, %p132
      %p134 = scmp.ne.s32.totalorder %s125, %s126
      %p135 = scmp.eq.s32.totalorder %s19, 0
      %p136 = por %p134, %p135
      %p137 = scmp.ne.s32.totalorder %s125, %s126
      %p138 = scmp.eq.s32.totalorder %s20, 1
      %p139 = por %p137, %p138
      %p141 = scmp.ne.s32.totalorder %s126, %s140
      %p142 = scmp.eq.s32.totalorder %s20, 0
      %p143 = por %p141, %p142
      %s144 = ssub.s32 %s21, %s33
      %p145 = scmp.eq.s32.totalorder %s144, 0
      %s147 = sadd.s32 %s146, 1
      %s148 = scalar_select %p145, %s146, %s147
      %p151 = pneg %p145
      %p152 = scmp.eq.s32.totalorder %s14, 1
      %p153 = por %p151, %p152
      %p154 = scmp.ne.s32.totalorder %s146, %s149
      %p155 = scmp.eq.s32.totalorder %s14, 0
      %p156 = por %p154, %p155
      %p157 = scmp.ne.s32.totalorder %s146, %s149
      %p158 = scmp.eq.s32.totalorder %s19, 1
      %p159 = por %p157, %p158
      %p160 = scmp.ne.s32.totalorder %s149, %s150
      %p161 = scmp.eq.s32.totalorder %s19, 0
      %p162 = por %p160, %p161
      %p163 = scmp.ne.s32.totalorder %s149, %s150
      %p164 = scmp.eq.s32.totalorder %s20, 1
      %p165 = por %p163, %p164
      %p167 = scmp.ne.s32.totalorder %s150, %s166
      %p168 = scmp.eq.s32.totalorder %s20, 0
      %p169 = por %p167, %p168
      %p170 = scmp.le.s32.totalorder 1, %s14
      %p171 = scmp.lt.s32.totalorder %s14, 3
      %p172 = pnand %p170, %p171
      %p173 = pneg %p172
      // Predicated region
      $region9: #{tpu_custom_call.1} parent=5 // pred_check
        _
      $region10: #{tpu_custom_call.1} parent=5 // pred_check_branch
        %175 = sbr.rel (%p172) target = $region12
      $region11: #{tpu_custom_call.1} parent=5 // pred_region
        %s176 = ssub.s32 %s14, 1
        // Predicated region
        $region13: #{tpu_custom_call.1} parent=11 // pred_check
          %p177 = pneg %p73
        $region14: #{tpu_custom_call.1} parent=11 // pred_check_branch
          %179 = sbr.rel (%p177) target = $region16
        $region15: #{tpu_custom_call.1} parent=11 // pred_region
          _
        $region16: #{tpu_custom_call.1} parent=11 // pred_fallthru
          _
        // Predicated region
        $region17: #{tpu_custom_call.1} parent=11 // pred_check
          %p180 = pneg %p94
        $region18: #{tpu_custom_call.1} parent=11 // pred_check_branch
          %182 = sbr.rel (%p180) target = $region20
        $region19: #{tpu_custom_call.1} parent=11 // pred_region
          _
        $region20: #{tpu_custom_call.1} parent=11 // pred_fallthru
          _
        // Predicated region
        $region21: #{tpu_custom_call.1} parent=11 // pred_check
          %p183 = pneg %p115
        $region22: #{tpu_custom_call.1} parent=11 // pred_check_branch
          %185 = sbr.rel (%p183) target = $region24
        $region23: #{tpu_custom_call.1} parent=11 // pred_region
          _
        $region24: #{tpu_custom_call.1} parent=11 // pred_fallthru
          _
        // Predicated region
        $region25: #{tpu_custom_call.1} parent=11 // pred_check
          %p186 = pneg %p136
        $region26: #{tpu_custom_call.1} parent=11 // pred_check_branch
          %188 = sbr.rel (%p186) target = $region28
        $region27: #{tpu_custom_call.1} parent=11 // pred_region
          _
        $region28: #{tpu_custom_call.1} parent=11 // pred_fallthru
          _
      $region12: #{tpu_custom_call.1} parent=5 // pred_fallthru
        _
      %p189 = scmp.lt.s32.totalorder %s14, 2
      // Predicated region
      $region29: #{tpu_custom_call.1} parent=5 // pred_check
        %p190 = pneg %p189
      $region30: #{tpu_custom_call.1} parent=5 // pred_check_branch
        %192 = sbr.rel (%p190) target = $region32
      $region31: #{tpu_custom_call.1} parent=5 // pred_region
        // Predicated region
        $region33: #{tpu_custom_call.1} parent=31 // pred_check
          %p193 = pneg %p46
        $region34: #{tpu_custom_call.1} parent=31 // pred_check_branch
          %195 = sbr.rel (%p193) target = $region36
        $region35: #{tpu_custom_call.1} parent=31 // pred_region
          %p196 = scmp.lt.s32.totalorder %s21, 1
          %s197 = scalar_select %p196, %s21, 1
          %s198 = smul.addr %s197, 8
          %s199 = scalar_lea.vmem %s0, %s198
        $region36: #{tpu_custom_call.1} parent=31 // pred_fallthru
          _
      $region32: #{tpu_custom_call.1} parent=5 // pred_fallthru
        _
      %p200 = scmp.le.s32.totalorder 1, %s14
      %p201 = scmp.lt.s32.totalorder %s14, 3
      %p202 = pnand %p200, %p201
      %p203 = pneg %p202
      // Predicated region
      $region37: #{tpu_custom_call.1} parent=5 // pred_check
        _
      $region38: #{tpu_custom_call.1} parent=5 // pred_check_branch
        %205 = sbr.rel (%p202) target = $region40
      $region39: #{tpu_custom_call.1} parent=5 // pred_region
        %s206 = ssub.s32 %s14, 1
        %p207 = scmp.lt.s32.totalorder %s23, 1
        %s208 = scalar_select %p207, %s23, 1
        %s209 = smul.addr %s208, 8
        %s210 = scalar_lea.vmem %s0, %s209
        %p211 = pneg %p52
        %p212 = pneg %p49
        %p213 = pneg %p73
        %p214 = pneg %p70
        %p215 = pneg %p94
        %p216 = pneg %p91
        %p217 = pneg %p115
        %p218 = pneg %p112
        %p219 = pneg %p136
        %p220 = pneg %p133
        %p221 = pneg %p162
        %p222 = pneg %p159
        %s223 = sand.u32 %s149, 1
        %s224 = scalar_lea.sflag [#allocation4], %s223
        %s225 = sand.u32 %s149, 1
        %s226 = smul.addr %s225, 8
        %s227 = scalar_lea.vmem [#allocation3], %s226
        %p228 = scmp.lt.s32.totalorder %s23, 1
        %s229 = scalar_select %p228, %s23, 1
        %s230 = smul.addr %s229, 8
        %s231 = scalar_lea.vmem %s0, %s230
        %p232 = scmp.eq.s32.totalorder %s24, 0
        // Predicated region
        $region41: #{tpu_custom_call.1} parent=39 // pred_check
          %p233 = pneg %p232
        $region42: #{tpu_custom_call.1} parent=39 // pred_check_branch
          %235 = sbr.rel (%p233) target = $region44
        $region43: #{tpu_custom_call.1} parent=39 // pred_region
          %236 = vst [vmem:[#allocation2] sm:$0xff] 0.0
        $region44: #{tpu_custom_call.1} parent=39 // pred_fallthru
          _
        %v237 = vld [vmem:[%s231] sm:$0xff]
        %v238 = vld [vmem:[%s1] sm:$0xff]
        %v239 = vld [vmem:[%s1 + $0x8] sm:$0xff]
        %v240 = vld [vmem:[%s1 + $0x10] sm:$0xff]
        %v241 = vld [vmem:[%s1 + $0x18] sm:$0xff]
        %v242 = vld [vmem:[%s2] sm:$0x1]
        %v244 = vperm.slane %v242, 0
        %vm246 = vcmask 261120
        %v248 = vsel %vm246, %v237, 0
        %250 = vmatpush.msra.mxu0 0.0
        %251 = vmatpush.msra.mxu0 0.0
        %252 = vmatpush.msra.mxu0 0.0
        %253 = vmatpush.msra.mxu0 0.0
        %254 = vmatpush.msra.mxu0 0.0
        %255 = vmatpush.msra.mxu0 0.0
        %256 = vmatpush.msra.mxu0 0.0
        %257 = vmatpush.msra.mxu0 0.0
        %258 = vmatpush.msra.mxu0 0.0
        %259 = vmatpush.msra.mxu0 0.0
        %260 = vmatpush.msra.mxu0 0.0
        %261 = vmatpush.msra.mxu0 0.0
        %262 = vmatpush.msra.mxu0 %v241
        %263 = vmatpush.msra.mxu0 %v240
        %264 = vmatpush.msra.mxu0 %v239
        %265 = vmatpush.msra.mxu0 %v238
        %266 = vmatmul.f32.gmra.mxu0 %v248
        %v267 = vpop.f32.mrf.mxu0
        %v268 = vadd.f32 %v244, %v267
        %269 = vdwg.mxu0
        %v270 = vmax.f32 %v268, 0.0
        %v271 = vld [vmem:[#allocation2] sm:$0xff]
        %v272 = vld [vmem:[%s3] sm:$0xff]
        %v273 = vld [vmem:[%s3 + $0x8] sm:$0xff]
        %vm274 = vcmask 130048
        %v276 = vsel %vm274, %v270, 0
        %278 = vmatpush.msra.mxu0 0.0
        %279 = vmatpush.msra.mxu0 0.0
        %280 = vmatpush.msra.mxu0 0.0
        %281 = vmatpush.msra.mxu0 0.0
        %282 = vmatpush.msra.mxu0 0.0
        %283 = vmatpush.msra.mxu0 0.0
        %284 = vmatpush.msra.mxu0 0.0
        %285 = vmatpush.msra.mxu0 0.0
        %286 = vmatpush.msra.mxu0 0.0
        %287 = vmatpush.msra.mxu0 0.0
        %288 = vmatpush.msra.mxu0 0.0
        %289 = vmatpush.msra.mxu0 0.0
        %290 = vmatpush.msra.mxu0 0.0
        %291 = vmatpush.msra.mxu0 0.0
        %292 = vmatpush.msra.mxu0 %v273
        %293 = vmatpush.msra.mxu0 %v272
        %294 = vmatmul.f32.gmra.mxu0 %v276
        %v295 = vpop.f32.mrf.mxu0
        %v296 = vadd.f32 0.0, %v295
        %297 = vdwg.mxu0
        %v298 = vadd.f32 %v271, %v296
        %299 = vst [vmem:[#allocation2] sm:$0xff] %v298
        // Predicated region
        $region45: #{tpu_custom_call.1} parent=39 // pred_check
          %p300 = pneg %p232
        $region46: #{tpu_custom_call.1} parent=39 // pred_check_branch
          %302 = sbr.rel (%p300) target = $region48
        $region47: #{tpu_custom_call.1} parent=39 // pred_region
          %v303 = vld [vmem:[#allocation2] sm:$0xff]
          %v304 = vld [vmem:[%s4] sm:$0x1]
          %v306 = vperm.slane %v304, 0
          %v308 = vadd.f32 %v303, %v306
          %v309 = vmax.f32 %v308, 0.0
          %v310 = vmin.f32 %v309, 1.0
          %311 = vst [vmem:[%s227] sm:$0xff] %v310
        $region48: #{tpu_custom_call.1} parent=39 // pred_fallthru
          _
        %s312 = sand.u32 %s149, 1
        %s313 = scalar_lea.sflag [#allocation4], %s312
        %s314 = sand.u32 %s149, 1
        %s315 = smul.addr %s314, 8
        %s316 = scalar_lea.vmem [#allocation3], %s315
        // Predicated region
        $region49: #{tpu_custom_call.1} parent=39 // pred_check
          %p317 = pneg %p159
        $region50: #{tpu_custom_call.1} parent=39 // pred_check_branch
          %319 = sbr.rel (%p317) target = $region52
        $region51: #{tpu_custom_call.1} parent=39 // pred_region
          %321 = vsyncadd %s313, 0
          %s322 = smul.addr %s23, 8
          %s323 = scalar_lea.hbm %s5, %s322
          %s325 = sshll.u32 %s316, 4
          %s326 = int_to_ptr.vmem [resolvable:$true] %s325
          %s327 = sshll.u32 %s323, 4
          %s328 = int_to_ptr.hbm [resolvable:$true] %s327
          %330 = dma.vmem_to_hbm [thread:$0]  %s326, 128, %s328, %s313
        $region52: #{tpu_custom_call.1} parent=39 // pred_fallthru
          _
      $region40: #{tpu_custom_call.1} parent=5 // pred_fallthru
        _
      %p331 = scmp.le.s32.totalorder 2, %s14
      // Predicated region
      $region53: #{tpu_custom_call.1} parent=5 // pred_check
        %p332 = pneg %p331
      $region54: #{tpu_custom_call.1} parent=5 // pred_check_branch
        %334 = sbr.rel (%p332) target = $region56
      $region55: #{tpu_custom_call.1} parent=5 // pred_region
        %s335 = ssub.s32 %s14, 2
        // Predicated region
        $region57: #{tpu_custom_call.1} parent=55 // pred_check
          %p336 = pneg %p165
        $region58: #{tpu_custom_call.1} parent=55 // pred_check_branch
          %338 = sbr.rel (%p336) target = $region60
        $region59: #{tpu_custom_call.1} parent=55 // pred_region
          %s339 = sand.u32 %s150, 1
          %s340 = scalar_lea.sflag [#allocation4], %s339
          %s341 = sand.u32 %s150, 1
          %s342 = smul.addr %s341, 8
          %s343 = scalar_lea.vmem [#allocation3], %s342
          %345 = dma.done %s340, 128
        $region60: #{tpu_custom_call.1} parent=55 // pred_fallthru
          _
      $region56: #{tpu_custom_call.1} parent=5 // pred_fallthru
        _
    $region6: #{tpu_custom_call.1} parent=1 // loop_footer
      %s18 = sadd.s32 1, %s14
    $region7: #{tpu_custom_call.1} parent=1 // loop_footer_branch
      %13 = sbr.rel target = $region3
    $region8: #{tpu_custom_call.1} parent=1 // loop_exit
      _
    %346 = vsyncpa [#allocation4], 1
    %s347 = scalar_lea.sflag [#allocation4], 1
    %348 = vsyncpa %s347, 1

</llo_original>
